<compile_context>
chip_gen: v7x
topology: tpu7x:2x2x1
jax: 0.10.0
libtpu: 0.0.40
codegen_flags: <defaults>
</compile_context>

<pallas_src>
import functools
import math

import jax
import jax.numpy as jnp
from jax.experimental import pallas as pl
from jax.experimental.pallas import tpu as pltpu

_LANE = 128
_SMALL_FULL_BLOCK_BYTES = 2 << 20   # below this, one full-extent block is fine


def _gate_mul_kernel(tile_reps, x_ref, gate_ref, o_ref):
    # gate_ref is either (1, D) (broadcast) or a periodic (P, 128) block that is
    # tiled up to the (TB, 128) x-block.  Gate is f32; result cast to out dtype.
    gate = gate_ref[...]
    if tile_reps > 1:
        gate = jnp.tile(gate, (tile_reps, 1))
    o_ref[...] = (x_ref[...] * gate).astype(o_ref.dtype)


def _vmem_policy():
    """(vmem_limit_bytes, target_block_bytes) sized per TPU generation."""
    cap = 0
    try:
        cap = int(getattr(pltpu.get_tpu_info(), "vmem_capacity_bytes", 0))
    except Exception:
        cap = 0
    if cap >= (128 << 20):          # v5e / v6e: 128 MiB physical VMEM
        return 64 << 20, 8 << 20
    # v7x (64 MiB physical) or unknown: conservative budget.
    # 2 buffers x (in + out) x 5 MiB = 20 MiB, well under the 32 MiB limit.
    return 32 << 20, 5 << 20


def _pick_tile_rows(n_rows, n_lanes, itemsize, row_multiple, target_block_bytes):
    """Rows per block: ~target_block_bytes, rounded to row_multiple."""
    full_bytes = n_rows * n_lanes * itemsize
    if full_bytes <= _SMALL_FULL_BLOCK_BYTES or n_rows <= row_multiple:
        return n_rows                       # one full-extent block (always legal)
    bytes_per_row = n_lanes * itemsize
    tb = (target_block_bytes // bytes_per_row) // row_multiple * row_multiple
    tb = max(tb, row_multiple)
    # Keep at least 2 grid steps so ("parallel",) can feed both v7x TensorCores.
    if 2 * tb > n_rows:
        half = (n_rows // 2) // row_multiple * row_multiple
        tb = half if half >= row_multiple else n_rows
    return tb


def feature_selector_forward(prev_x, mu, noise, sigma, training):
    """prev_x: (B, D); mu, noise: (D,); sigma: python float; training: python bool."""
    B, D = prev_x.shape
    itemsize = jnp.dtype(prev_x.dtype).itemsize
    sublane = max(8, 32 // itemsize)        # f32: 8, bf16: 16, int8/fp8: 32

    # Precompute the tiny O(D) gate row in f32 (not the B x D stream — that stays
    # in the kernel): clamp(mu + sigma * noise * training + 0.5, 0, 1).
    z = mu.astype(jnp.float32)
    if training:
        z = z + jnp.float32(sigma) * noise.astype(jnp.float32)
    gate_1d = jnp.clip(z + 0.5, 0.0, 1.0)

    vmem_limit, target_block_bytes = _vmem_policy()

    # Lane-dense repack: whenever the flattened stream forms whole 128-lane rows,
    # reshape (B, D) -> (B*D/128, 128) (free, row-major) and make the gate a
    # periodic (P, 128) block, P = lcm(D, 128) / 128.  Keeps every output store
    # an unmasked full-lane vst.  (B*D % 128 == 0 guarantees B2 % P == 0.)
    orig_shape = None
    if D % _LANE == 0:
        x2, B2, D2 = prev_x, B, D
        gate2, P = gate_1d.reshape(1, D), 1
    elif (B * D) % _LANE == 0:
        lcm = math.lcm(D, _LANE)
        P = lcm // _LANE
        B2, D2 = (B * D) // _LANE, _LANE
        x2 = prev_x.reshape(B2, D2)
        gate2 = jnp.tile(gate_1d, lcm // D).reshape(P, _LANE)
        orig_shape = (B, D)
    else:
        # TODO(synk): D with no whole-lane repack falls back to masked partial stores.
        x2, B2, D2 = prev_x, B, D
        gate2, P = gate_1d.reshape(1, D), 1

    row_multiple = math.lcm(sublane, P)
    TB = _pick_tile_rows(B2, D2, itemsize, row_multiple, target_block_bytes)
    grid = (pl.cdiv(B2, TB),)
    tile_reps = (TB // P) if P > 1 else 1

    x_spec = pl.BlockSpec((TB, D2), lambda i: (i, 0))
    gate_spec = pl.BlockSpec((P, D2), lambda i: (0, 0))    # resident across tiles
    out_spec = pl.BlockSpec((TB, D2), lambda i: (i, 0))

    cost = pl.CostEstimate(
        flops=B2 * D2,
        transcendentals=0,
        bytes_accessed=2 * B2 * D2 * itemsize + P * D2 * 4,
    )

    out = pl.pallas_call(
        functools.partial(_gate_mul_kernel, tile_reps),
        out_shape=jax.ShapeDtypeStruct((B2, D2), prev_x.dtype),
        grid_spec=pltpu.PrefetchScalarGridSpec(
            num_scalar_prefetch=0,
            grid=grid,
            in_specs=[x_spec, gate_spec],
            out_specs=out_spec,
        ),
        compiler_params=pltpu.CompilerParams(
            dimension_semantics=("parallel",),
            vmem_limit_bytes=vmem_limit,
        ),
        cost_estimate=cost,
    )(x2, gate2)

    if orig_shape is not None:
        out = out.reshape(orig_shape)
    return out


if __name__ == "__main__":
    key = jax.random.PRNGKey(0)
    k_x, k_noise, k_x2, k_noise2, k_mu2 = jax.random.split(key, 5)

    batch, input_dim = 4, 32
    sigma = 0.5

    prev_x = jax.random.normal(k_x, (batch, input_dim), dtype=jnp.float32)
    # mu initialized as 0.0 * randn(input_dim) == zeros (as in the module __init__)
    mu = jnp.zeros((input_dim,), dtype=jnp.float32)
    # noise ~ N(0, 1), resampled by the caller (torch does .normal_() per forward)
    noise = jax.random.normal(k_noise, (input_dim,), dtype=jnp.float32)

    # --- training mode ---
    out_train = jax.block_until_ready(
        feature_selector_forward(prev_x, mu, noise, sigma, training=True))
    gate_ref = jnp.clip(mu + sigma * noise + 0.5, 0.0, 1.0)
    ref_train = prev_x * gate_ref[None, :]
    assert out_train.shape == (batch, input_dim)
    assert jnp.allclose(out_train, ref_train, atol=1e-6), "train-mode mismatch"

    # --- eval mode (noise term dropped) ---
    out_eval = jax.block_until_ready(
        feature_selector_forward(prev_x, mu, noise, sigma, training=False))
    ref_eval = prev_x * jnp.clip(mu + 0.5, 0.0, 1.0)[None, :]
    assert jnp.allclose(out_eval, ref_eval, atol=1e-6), "eval-mode mismatch"

    # --- second shape exercising the periodic-gate repack path (D=96 -> P=3) ---
    b2, d2 = 16, 96
    x_b = jax.random.normal(k_x2, (b2, d2), dtype=jnp.float32)
    mu_b = 0.1 * jax.random.normal(k_mu2, (d2,), dtype=jnp.float32)
    noise_b = jax.random.normal(k_noise2, (d2,), dtype=jnp.float32)
    out_b = jax.block_until_ready(
        feature_selector_forward(x_b, mu_b, noise_b, sigma, training=True))
    ref_b = x_b * jnp.clip(mu_b + sigma * noise_b + 0.5, 0.0, 1.0)[None, :]
    assert jnp.allclose(out_b, ref_b, atol=1e-6), "periodic-gate mismatch"

    print("KERNEL_OK")
</pallas_src>

<mosaic_0001>
module attributes {stable_mosaic.version = 11 : i64} {
  func.func @_gate_mul_kernel(%arg0: i32, %arg1: memref<1x128xf32, #tpu.memory_space<vmem>>, %arg2: memref<1x128xf32, #tpu.memory_space<vmem>>, %arg3: memref<1x128xf32, #tpu.memory_space<vmem>>) attributes {dimension_semantics = [#tpu.dimension_semantics<parallel>], iteration_bounds = array<i64: 1>, scalar_prefetch = 0 : i64, scratch_operands = 0 : i64, tpu.core_type = #tpu.core_type<tc>, window_params = [{transform_indices = @transform_0, window_bounds = array<i64: 1, 128>}, {pipeline_mode = #tpu.pipeline_mode<synchronous>, transform_indices = @transform_1, window_bounds = array<i64: 1, 128>}, {transform_indices = @transform_2, window_bounds = array<i64: 1, 128>}]} {
    %c0 = arith.constant 0 : index
    %c0_0 = arith.constant 0 : index
    %0 = vector.load %arg2[%c0, %c0_0] : memref<1x128xf32, #tpu.memory_space<vmem>>, vector<1x128xf32>
    %c0_1 = arith.constant 0 : index
    %c0_2 = arith.constant 0 : index
    %1 = vector.load %arg1[%c0_1, %c0_2] : memref<1x128xf32, #tpu.memory_space<vmem>>, vector<1x128xf32>
    %2 = arith.mulf %1, %0 : vector<1x128xf32>
    %c0_3 = arith.constant 0 : index
    %c0_4 = arith.constant 0 : index
    %3 = vector.load %arg3[%c0_3, %c0_4] : memref<1x128xf32, #tpu.memory_space<vmem>>, vector<1x128xf32>
    tpu.vector_store %arg3[%c0_3, %c0_4], %2 {strides = array<i32>} : memref<1x128xf32, #tpu.memory_space<vmem>>, vector<1x128xf32>,
    return
  }
  func.func @transform_0(%arg0: i32) -> (i32, i32) {
    %c0_i32 = arith.constant 0 : i32
    %c0_i32_0 = arith.constant 0 : i32
    return %arg0, %c0_i32 : i32, i32
  }
  func.func @transform_1(%arg0: i32) -> (i32, i32) {
    %c0_i32 = arith.constant 0 : i32
    %c0_i32_0 = arith.constant 0 : i32
    %c0_i32_1 = arith.constant 0 : i32
    return %c0_i32, %c0_i32_0 : i32, i32
  }
  func.func @transform_2(%arg0: i32) -> (i32, i32) {
    %c0_i32 = arith.constant 0 : i32
    %c0_i32_0 = arith.constant 0 : i32
    return %arg0, %c0_i32 : i32, i32
  }
}

</mosaic_0001>

<llo_original>
// kernel: tpu_custom_call.1
$region0: #{tpu_custom_call.1}
  #allocation0 [shape = 'u32[]', space=smem, size = 0x4, offset = 0x4, fixed_abs, tag = 'smem constant byte address 0x4 - core index']
  #allocation1 [shape = 'u32[144,128]{1,0:T(1,128)}', space=vmem, size = 0x12000, scoped, tag = 'internal scratch']
  %s0 = inlined_call_operand.hbm [shape: f32[1,128], index: 0, kind: input, shape index: {}]
  %s1 = inlined_call_operand.vmem [shape: f32[1,128], index: 1, kind: input, shape index: {}]
  %s2 = inlined_call_operand.hbm [shape: f32[1,128], index: 2, kind: output, shape index: {}]
  %s3 = sld [smem:[#allocation0]]
  $region22: #{tpu_custom_call.1} parent=0
    _
  %s5 = ssub.s32 1, %s3
  %s6 = scalar_select 0, %s5, %s3
  $region1: #{tpu_custom_call.1} parent=0
    #allocation2 [shape = 'u8[512]{0}', space=vmem, size = 0x400, scoped, tag = 'input window, operand 0, single buffered']
    #allocation3 [shape = 's32[1]{0}', space=sflag, size = 0x4, scoped, tag = 'scoped memory for tpu_custom_call.1']
    #allocation4 [shape = 's32[1]{0}', space=sflag, size = 0x4, scoped, tag = 'scoped memory for tpu_custom_call.1']
    #allocation5 [shape = 'u8[512]{0}', space=vmem, size = 0x400, scoped, tag = 'output window, operand 0, single buffered']
    %7 = vsyncpa [#allocation3], 0
    %8 = vsyncpa [#allocation4], 0
    // Predicated region
    $region2: #{tpu_custom_call.1} parent=1 // pred_check
      _
    $region3: #{tpu_custom_call.1} parent=1 // pred_check_branch
      %10 = sbr.rel (0) target = $region5
    $region4: #{tpu_custom_call.1} parent=1 // pred_region
      %s12 = ssub.s32 16, 16
      %13 = vsyncadd [#allocation3], %s12
      %s15 = sshll.u32 [#allocation2], 4
      %s16 = int_to_ptr.vmem [resolvable:$true] %s15
      %18 = dma.hbm_to_vmem [thread:$0]  %s0, 16, %s16, [#allocation3]
    $region5: #{tpu_custom_call.1} parent=1 // pred_fallthru
      _
    // Predicated region
    $region6: #{tpu_custom_call.1} parent=1 // pred_check
      _
    $region7: #{tpu_custom_call.1} parent=1 // pred_check_branch
      %20 = sbr.rel (0) target = $region9
    $region8: #{tpu_custom_call.1} parent=1 // pred_region
      _
    $region9: #{tpu_custom_call.1} parent=1 // pred_fallthru
      _
    // Predicated region
    $region10: #{tpu_custom_call.1} parent=1 // pred_check
      _
    $region11: #{tpu_custom_call.1} parent=1 // pred_check_branch
      %22 = sbr.rel (0) target = $region13
    $region12: #{tpu_custom_call.1} parent=1 // pred_region
      %23 = dma.done [#allocation3], 16
    $region13: #{tpu_custom_call.1} parent=1 // pred_fallthru
      _
    %v24 = vld [vmem:[%s1] sm:$0x1]
    %v25 = vld [vmem:[#allocation2] sm:$0x1]
    %v26 = vmul.f32 %v25, %v24
    %27 = vst [vmem:[#allocation5] sm:$0x1] %v26
    // Predicated region
    $region14: #{tpu_custom_call.1} parent=1 // pred_check
      _
    $region15: #{tpu_custom_call.1} parent=1 // pred_check_branch
      %29 = sbr.rel (0) target = $region17
    $region16: #{tpu_custom_call.1} parent=1 // pred_region
      %s31 = ssub.s32 16, 16
      %32 = vsyncadd [#allocation4], %s31
      %s34 = sshll.u32 [#allocation5], 4
      %s35 = int_to_ptr.vmem [resolvable:$true] %s34
      %37 = dma.vmem_to_hbm [thread:$0]  %s35, 16, %s2, [#allocation4]
    $region17: #{tpu_custom_call.1} parent=1 // pred_fallthru
      _
    // Predicated region
    $region18: #{tpu_custom_call.1} parent=1 // pred_check
      _
    $region19: #{tpu_custom_call.1} parent=1 // pred_check_branch
      %39 = sbr.rel (0) target = $region21
    $region20: #{tpu_custom_call.1} parent=1 // pred_region
      %40 = dma.done [#allocation4], 16
    $region21: #{tpu_custom_call.1} parent=1 // pred_fallthru
      _
    %41 = vsyncpa [#allocation3], 1
    %42 = vsyncpa [#allocation4], 1

</llo_original>
